<compile_context>
chip_gen: v6e
topology: v6e:2x2x1
jax: 0.10.0
libtpu: 0.0.40
codegen_flags: <defaults>
</compile_context>

<pallas_src>
import functools

import jax
import jax.numpy as jnp
from jax.experimental import pallas as pl
from jax.experimental.pallas import tpu as pltpu


def _round_up(v, m):
    return ((v + m - 1) // m) * m


def _divisors(n):
    return [d for d in range(1, n + 1) if n % d == 0]


def _hw_tile_candidates(hw, align):
    cands = [d for d in range(align, hw + 1, align) if hw % d == 0]
    if hw not in cands:
        cands.append(hw)
    return sorted(cands)


def _vmem_budget_bytes():
    """Generation-aware scoped-VMEM request (v5e/v6e: 128 MiB phys, v7x: 64 MiB/TC)."""
    try:
        info = pltpu.get_tpu_info()
        cap = getattr(info, "vmem_capacity_bytes", None) or (64 << 20)
    except Exception:
        cap = 64 << 20  # conservative default (v7x per-TensorCore VMEM)
    return int(min(cap // 2, 48 << 20))


def _kernel1_step_bytes(nb, thw, L, Cin, Ct, Ctp, Cp, Cout, in_bytes):
    # Pipelined blocks are double-buffered by the Pallas runtime.
    pipelined = 2 * (nb * thw * Cin * in_bytes            # x tile
                     + nb * L * Ct * in_bytes             # t tile
                     + nb * thw * Cout * 4                # pre tile (f32)
                     + 2 * nb * Cout * 4)                 # sum / sq tiles
    consts = 2 * ((Cin + Ct) * (Ctp + Cp) * in_bytes + 2 * Cp * 4)  # weights+biases
    # f32 intermediates the body materializes in VMEM.
    temps = 4 * (nb * thw * (Ctp + Cp)       # fused x projection
                 + nb * L * (Ctp + Cp)       # fused t projection
                 + 2 * nb * thw * L          # logits + softmax
                 + 2 * nb * thw * Cp)        # attn @ t3 and residual
    return pipelined + consts + temps


def _pick_kernel1_tiles(N, HW, L, Cin, Ct, Ctp, Cp, Cout, in_bytes, budget):
    # bf16 inputs pack 2 rows/sublane -> prefer 16-aligned pixel tiles.
    align = 16 if in_bytes < 4 else 8
    hw_cands = _hw_tile_candidates(HW, align)
    n_cands = _divisors(N)

    def fits(nb_, thw_):
        return _kernel1_step_bytes(nb_, thw_, L, Cin, Ct, Ctp, Cp, Cout,
                                   in_bytes) <= budget

    thw = hw_cands[0]
    for cand in hw_cands:
        if fits(1, cand):
            thw = cand
    nb = 1
    for cand in n_cands:
        if fits(cand, thw):
            nb = cand

    # Guarantee >= 2 grid steps (pipelining on every gen, megacore on v7x),
    # preferring to split the batch (no redundant token-projection compute).
    def steps(nb_, thw_):
        return (N // nb_) * (HW // thw_)

    while steps(nb, thw) < 2:
        smaller_nb = [d for d in n_cands if d < nb]
        smaller_thw = [d for d in hw_cands if d < thw]
        if smaller_nb:
            nb = smaller_nb[-1]
        elif smaller_thw:
            thw = smaller_thw[-1]
        else:
            break
    return nb, thw


def _pick_kernel2_tile(rows, cout, budget):
    bytes_per_row = 2 * cout * (4 + 4)          # pre read + out write, double-buffered
    cap = max(8, min(2048, (budget // max(bytes_per_row, 1)) // 8 * 8))
    tr = min(cap, 1024)
    if tr >= rows:
        # Whole thing would fit in one step; aim for 2 so both v7x TCs get work.
        half = _round_up((rows + 1) // 2, 8)
        tr = half if half < rows else rows
    return tr


# ----------------------- Kernel 1: projection + attention --------------------
def projector_kernel(x_ref, t_ref, wx_ref, wt_ref, b3_ref, bd_ref,
                     pre_ref, sum_ref, sq_ref, *, ctp):
    nb, thw, cin = x_ref.shape
    _, l, ct = t_ref.shape
    cp = wx_ref.shape[1] - ctp
    cout = pre_ref.shape[-1]
    mm_dtype = x_ref.dtype

    # Fused projections: each input matrix goes through the MXU exactly once,
    # with a wide lane-dense output:  x @ [W1^T | Wd^T],  t @ [W2^T | W3^T].
    x2 = x_ref[...].reshape(nb * thw, cin)
    t2 = t_ref[...].reshape(nb * l, ct)
    xp = jnp.dot(x2, wx_ref[...], preferred_element_type=jnp.float32)
    tp = jnp.dot(t2, wt_ref[...], preferred_element_type=jnp.float32)

    x_q = xp[:, :ctp].reshape(nb, thw, ctp)                 # (nb, thw, ctp)
    xd = xp[:, ctp:].reshape(nb, thw, cp) + bd_ref[...]     # (nb, thw, cp)
    t_q = tp[:, :ctp].reshape(nb, l, ctp)                   # (nb, l,  ctp)
    t3 = tp[:, ctp:].reshape(nb, l, cp) + b3_ref[...]       # (nb, l,  cp)

    # Attention logits + softmax over tokens (f32 vector math).
    s = jnp.einsum('nhc,nlc->nhl', x_q.astype(mm_dtype), t_q.astype(mm_dtype),
                   preferred_element_type=jnp.float32)      # (nb, thw, l)
    s = s - jnp.max(s, axis=-1, keepdims=True)
    p = jnp.exp(s)
    attn = p * pl.reciprocal(jnp.sum(p, axis=-1, keepdims=True), approx=True)

    # Mix tokens back into pixels + (downsampled) residual.
    a = jnp.einsum('nhl,nlo->nho', attn.astype(mm_dtype), t3.astype(mm_dtype),
                   preferred_element_type=jnp.float32)      # (nb, thw, cp)
    pre = (xd + a)[:, :, :cout]          # drop lane padding before the HBM store
    pre_ref[...] = pre.astype(pre_ref.dtype)

    # Partial BatchNorm statistics for this (batch-tile, pixel-tile) block (f32).
    sum_ref[...] = jnp.sum(pre, axis=1, keepdims=True).reshape(sum_ref.shape)
    sq_ref[...] = jnp.sum(pre * pre, axis=1, keepdims=True).reshape(sq_ref.shape)


# ------------------ Kernel 2: streaming normalize + ReLU ---------------------
def bn_relu_kernel(pre_ref, scale_ref, shift_ref, out_ref):
    y = pre_ref[...].astype(jnp.float32) * scale_ref[...] + shift_ref[...]
    out_ref[...] = jnp.maximum(y, 0.0).astype(out_ref.dtype)


# --------------------------------- Wrapper -----------------------------------
def projector_forward(x, t, params, *, matmul_dtype=jnp.bfloat16, eps=1e-5):
    N, HW, Cin = x.shape
    _, L, Ct = t.shape
    Cout = params["w3"].shape[0]

    Ctp = _round_up(Ct, 128)     # lane-dense token width (matmul internal only)
    Cp = _round_up(Cout, 128)    # lane-dense output width (matmul internal only)
    in_bytes = jnp.dtype(matmul_dtype).itemsize

    # ---- fused, lane-padded weights (trace-time glue; free at runtime) ------
    w1t, w2t = params["w1"].T, params["w2"].T            # (Cin, Ct), (Ct, Ct)
    w3t, wdt = params["w3"].T, params["wd"].T            # (Ct, Cout), (Cin, Cout)

    def pad_cols(m, width):
        return jnp.pad(m, ((0, 0), (0, width - m.shape[1])))

    wx = jnp.concatenate([pad_cols(w1t, Ctp), pad_cols(wdt, Cp)], axis=1)  # (Cin, Ctp+Cp)
    wt = jnp.concatenate([pad_cols(w2t, Ctp), pad_cols(w3t, Cp)], axis=1)  # (Ct,  Ctp+Cp)
    b3p = jnp.pad(params["b3"], (0, Cp - Cout)).reshape(1, Cp)
    bdp = jnp.pad(params["bd"], (0, Cp - Cout)).reshape(1, Cp)

    # bf16 matmul inputs (MXU-native, halves HBM->VMEM bytes); f32 accumulate.
    x_in = x.astype(matmul_dtype)
    t_in = t.astype(matmul_dtype)
    wx = wx.astype(matmul_dtype)
    wt = wt.astype(matmul_dtype)

    budget = _vmem_budget_bytes()
    nb, thw = _pick_kernel1_tiles(N, HW, L, Cin, Ct, Ctp, Cp, Cout,
                                  in_bytes, (budget * 3) // 5)
    n_hw = HW // thw

    kernel1 = functools.partial(projector_kernel, ctp=Ctp)

    pre, psum, psq = pl.pallas_call(
        kernel1,
        grid=(N // nb, n_hw),
        out_shape=(
            jax.ShapeDtypeStruct((N, HW, Cout), jnp.float32),
            jax.ShapeDtypeStruct((N, n_hw, 1, Cout), jnp.float32),
            jax.ShapeDtypeStruct((N, n_hw, 1, Cout), jnp.float32),
        ),
        in_specs=[
            pl.BlockSpec((nb, thw, Cin), lambda b, h: (b, h, 0)),
            pl.BlockSpec((nb, L, Ct), lambda b, h: (b, 0, 0)),
            pl.BlockSpec((Cin, Ctp + Cp), lambda b, h: (0, 0)),
            pl.BlockSpec((Ct, Ctp + Cp), lambda b, h: (0, 0)),
            pl.BlockSpec((1, Cp), lambda b, h: (0, 0)),
            pl.BlockSpec((1, Cp), lambda b, h: (0, 0)),
        ],
        out_specs=(
            pl.BlockSpec((nb, thw, Cout), lambda b, h: (b, h, 0)),
            pl.BlockSpec((nb, 1, 1, Cout), lambda b, h: (b, h, 0, 0)),
            pl.BlockSpec((nb, 1, 1, Cout), lambda b, h: (b, h, 0, 0)),
        ),
        compiler_params=pltpu.CompilerParams(
            dimension_semantics=("parallel", "parallel"),
            vmem_limit_bytes=budget),
    )(x_in, t_in, wx, wt, b3p, bdp)

    # ---- reduce partial stats -> per-channel scale/shift (tiny, JAX glue) ---
    cnt = float(N * HW)
    mean = jnp.sum(psum, axis=(0, 1, 2)) / cnt                         # (Cout,)
    # NOTE: E[x^2]-E[x]^2 cancels if |mean| >> std; fine for BN-style
    # near-zero-centered activations, clamped at 0 for safety.
    var = jnp.maximum(jnp.sum(psq, axis=(0, 1, 2)) / cnt - mean * mean, 0.0)
    inv_std = jax.lax.rsqrt(var + eps)
    scale = (params["gamma"] * inv_std).reshape(1, Cout)
    shift = (params["beta"] - mean * params["gamma"] * inv_std).reshape(1, Cout)

    # ---- kernel 2: tiled, mem-bound normalize + ReLU straight to (rows,Cout)
    rows = N * HW
    pre2 = pre.reshape(rows, Cout)
    tr = _pick_kernel2_tile(rows, Cout, budget)

    out2 = pl.pallas_call(
        bn_relu_kernel,
        grid=(pl.cdiv(rows, tr),),
        out_shape=jax.ShapeDtypeStruct((rows, Cout), jnp.float32),
        in_specs=[
            pl.BlockSpec((tr, Cout), lambda i: (i, 0)),
            pl.BlockSpec((1, Cout), lambda i: (0, 0)),
            pl.BlockSpec((1, Cout), lambda i: (0, 0)),
        ],
        out_specs=pl.BlockSpec((tr, Cout), lambda i: (i, 0)),
        compiler_params=pltpu.CompilerParams(
            dimension_semantics=("parallel",),
            vmem_limit_bytes=budget),
    )(pre2, scale, shift)

    return out2.reshape(N, HW, Cout)


# ----------------------------- Pure-JAX reference ----------------------------
def projector_reference(x, t, params):
    x_q = jnp.einsum("nhc,tc->nht", x, params["w1"])       # (N, HW, Ct)
    t_q = jnp.einsum("nlc,tc->nlt", t, params["w2"])       # (N, L,  Ct)
    a = jnp.einsum("nht,nlt->nhl", x_q, t_q)               # (N, HW, L)
    a = jax.nn.softmax(a, axis=2)
    t3 = jnp.einsum("nlc,oc->nlo", t, params["w3"]) + params["b3"]
    a = jnp.einsum("nhl,nlo->nho", a, t3)                  # (N, HW, Cout)
    xd = jnp.einsum("nhc,oc->nho", x, params["wd"]) + params["bd"]
    pre = xd + a
    mean = jnp.mean(pre, axis=(0, 1), keepdims=True)
    var = jnp.mean(jnp.square(pre - mean), axis=(0, 1), keepdims=True)
    y = (pre - mean) * jax.lax.rsqrt(var + 1e-5) * params["gamma"] + params["beta"]
    return jnp.maximum(y, 0.0)


# --------------------------- Parameter initialization ------------------------
def xavier_normal(key, shape):
    fan_out, fan_in = shape
    std = (2.0 / (fan_in + fan_out)) ** 0.5
    return std * jax.random.normal(key, shape, dtype=jnp.float32)


def init_params(key, in_channels, out_channels, token_channels):
    k1, k2, k3, k4, k5, k6 = jax.random.split(key, 6)
    params = {
        "w1": xavier_normal(k1, (token_channels, in_channels)),
        "w2": xavier_normal(k2, (token_channels, token_channels)),
        "w3": xavier_normal(k3, (out_channels, token_channels)),
        "b3": 0.01 * jax.random.normal(k4, (out_channels,), dtype=jnp.float32),
        "gamma": jnp.ones((out_channels,), dtype=jnp.float32),
        "beta": jnp.zeros((out_channels,), dtype=jnp.float32),
    }
    if in_channels != out_channels:
        params["wd"] = xavier_normal(k5, (out_channels, in_channels))
        params["bd"] = 0.01 * jax.random.normal(k6, (out_channels,), dtype=jnp.float32)
    else:
        # downsample is None in the PyTorch module -> identity pass-through
        params["wd"] = jnp.eye(out_channels, dtype=jnp.float32)
        params["bd"] = jnp.zeros((out_channels,), dtype=jnp.float32)
    return params


if __name__ == "__main__":
    N, HW, Cin, Cout, Ct, L = 2, 64, 32, 16, 8, 8  # HW = 8x8 spatial pixels

    key = jax.random.PRNGKey(0)
    kx, kt, kp = jax.random.split(key, 3)
    x = jax.random.normal(kx, (N, HW, Cin), dtype=jnp.float32)
    t = jax.random.normal(kt, (N, L, Ct), dtype=jnp.float32)
    params = init_params(kp, Cin, Cout, Ct)

    ref = jax.block_until_ready(projector_reference(x, t, params))

    # Full-precision matmul path: tight check.
    out_f32 = jax.block_until_ready(
        projector_forward(x, t, params, matmul_dtype=jnp.float32))
    assert out_f32.shape == (N, HW, Cout)
    assert jnp.max(jnp.abs(out_f32 - ref)) < 1e-2, "f32 path mismatch vs reference"

    # Default bf16 matmul path (MXU-native dtype): loose sanity check.
    out_bf16 = jax.block_until_ready(projector_forward(x, t, params))
    assert out_bf16.shape == (N, HW, Cout)
    assert jnp.all(jnp.isfinite(out_bf16))
    assert jnp.max(jnp.abs(out_bf16 - ref)) < 2e-1, "bf16 path mismatch vs reference"

    print("KERNEL_OK")
</pallas_src>

<mosaic_0001>
module attributes {stable_mosaic.version = 11 : i64} {
  func.func @projector_kernel(%arg0: i32, %arg1: i32, %arg2: memref<1x64x32xf32, #tpu.memory_space<vmem>>, %arg3: memref<1x8x8xf32, #tpu.memory_space<vmem>>, %arg4: memref<32x256xf32, #tpu.memory_space<vmem>>, %arg5: memref<8x256xf32, #tpu.memory_space<vmem>>, %arg6: memref<1x128xf32, #tpu.memory_space<vmem>>, %arg7: memref<1x128xf32, #tpu.memory_space<vmem>>, %arg8: memref<1x64x16xf32, #tpu.memory_space<vmem>>, %arg9: memref<1x1x1x16xf32, #tpu.memory_space<vmem>>, %arg10: memref<1x1x1x16xf32, #tpu.memory_space<vmem>>) attributes {dimension_semantics = [#tpu.dimension_semantics<parallel>, #tpu.dimension_semantics<parallel>], iteration_bounds = array<i64: 2, 1>, scalar_prefetch = 0 : i64, scratch_operands = 0 : i64, tpu.core_type = #tpu.core_type<tc>, window_params = [{transform_indices = @transform_0, window_bounds = array<i64: 1, 64, 32>}, {transform_indices = @transform_1, window_bounds = array<i64: 1, 8, 8>}, {pipeline_mode = #tpu.pipeline_mode<synchronous>, transform_indices = @transform_2, window_bounds = array<i64: 32, 256>}, {pipeline_mode = #tpu.pipeline_mode<synchronous>, transform_indices = @transform_3, window_bounds = array<i64: 8, 256>}, {pipeline_mode = #tpu.pipeline_mode<synchronous>, transform_indices = @transform_4, window_bounds = array<i64: 1, 128>}, {pipeline_mode = #tpu.pipeline_mode<synchronous>, transform_indices = @transform_5, window_bounds = array<i64: 1, 128>}, {transform_indices = @transform_6, window_bounds = array<i64: 1, 64, 16>}, {transform_indices = @transform_7, window_bounds = array<i64: 1, 1, 1, 16>}, {transform_indices = @transform_8, window_bounds = array<i64: 1, 1, 1, 16>}]} {
    %c0 = arith.constant 0 : index
    %c0_0 = arith.constant 0 : index
    %c0_1 = arith.constant 0 : index
    %0 = vector.load %arg2[%c0, %c0_0, %c0_1] : memref<1x64x32xf32, #tpu.memory_space<vmem>>, vector<1x64x32xf32>
    %1 = vector.shape_cast %0 : vector<1x64x32xf32> to vector<64x32xf32>
    %c0_2 = arith.constant 0 : index
    %c0_3 = arith.constant 0 : index
    %c0_4 = arith.constant 0 : index
    %2 = vector.load %arg3[%c0_2, %c0_3, %c0_4] : memref<1x8x8xf32, #tpu.memory_space<vmem>>, vector<1x8x8xf32>
    %3 = vector.shape_cast %2 : vector<1x8x8xf32> to vector<8x8xf32>
    %c0_5 = arith.constant 0 : index
    %c0_6 = arith.constant 0 : index
    %4 = vector.load %arg4[%c0_5, %c0_6] : memref<32x256xf32, #tpu.memory_space<vmem>>, vector<32x256xf32>
    %cst = arith.constant dense<0.000000e+00> : vector<64x256xf32>
    %5 = tpu.matmul %1, %4, %cst {dimension_numbers = #tpu.dot_dimension_numbers<[1], [0], [0], [1], [0, 0, 1, 1], [], []>} : vector<64x32xf32>, vector<32x256xf32>, vector<64x256xf32> -> vector<64x256xf32>
    %c0_7 = arith.constant 0 : index
    %c0_8 = arith.constant 0 : index
    %6 = vector.load %arg5[%c0_7, %c0_8] : memref<8x256xf32, #tpu.memory_space<vmem>>, vector<8x256xf32>
    %cst_9 = arith.constant dense<0.000000e+00> : vector<8x256xf32>
    %7 = tpu.matmul %3, %6, %cst_9 {dimension_numbers = #tpu.dot_dimension_numbers<[1], [0], [0], [1], [0, 0, 1, 1], [], []>} : vector<8x8xf32>, vector<8x256xf32>, vector<8x256xf32> -> vector<8x256xf32>
    %8 = vector.extract_strided_slice %5 {offsets = [0, 0], sizes = [64, 128], strides = [1, 1]} : vector<64x256xf32> to vector<64x128xf32>
    %9 = vector.shape_cast %8 : vector<64x128xf32> to vector<1x64x128xf32>
    %10 = vector.extract_strided_slice %5 {offsets = [0, 128], sizes = [64, 128], strides = [1, 1]} : vector<64x256xf32> to vector<64x128xf32>
    %11 = vector.shape_cast %10 : vector<64x128xf32> to vector<1x64x128xf32>
    %c0_10 = arith.constant 0 : index
    %c0_11 = arith.constant 0 : index
    %12 = vector.load %arg7[%c0_10, %c0_11] : memref<1x128xf32, #tpu.memory_space<vmem>>, vector<1x128xf32>
    %13 = vector.shape_cast %12 : vector<1x128xf32> to vector<1x1x128xf32>
    %14 = vector.broadcast %13 : vector<1x1x128xf32> to vector<1x64x128xf32>
    %15 = arith.addf %11, %14 : vector<1x64x128xf32>
    %16 = vector.extract_strided_slice %7 {offsets = [0, 0], sizes = [8, 128], strides = [1, 1]} : vector<8x256xf32> to vector<8x128xf32>
    %17 = vector.shape_cast %16 : vector<8x128xf32> to vector<1x8x128xf32>
    %18 = vector.extract_strided_slice %7 {offsets = [0, 128], sizes = [8, 128], strides = [1, 1]} : vector<8x256xf32> to vector<8x128xf32>
    %19 = vector.shape_cast %18 : vector<8x128xf32> to vector<1x8x128xf32>
    %c0_12 = arith.constant 0 : index
    %c0_13 = arith.constant 0 : index
    %20 = vector.load %arg6[%c0_12, %c0_13] : memref<1x128xf32, #tpu.memory_space<vmem>>, vector<1x128xf32>
    %21 = vector.shape_cast %20 : vector<1x128xf32> to vector<1x1x128xf32>
    %22 = vector.broadcast %21 : vector<1x1x128xf32> to vector<1x8x128xf32>
    %23 = arith.addf %19, %22 : vector<1x8x128xf32>
    "tpu.trace_start"() <{level = 10 : i32, message = "nhc,nlc->nhl"}> : () -> ()
    %cst_14 = arith.constant dense<0.000000e+00> : vector<1x64x8xf32>
    %24 = tpu.matmul %9, %17, %cst_14 {dimension_numbers = #tpu.dot_dimension_numbers<[2], [2], [1], [1], [0, 0, 0, 1, 1, 1], [0], [0]>} : vector<1x64x128xf32>, vector<1x8x128xf32>, vector<1x64x8xf32> -> vector<1x64x8xf32>
    "tpu.trace_stop"() : () -> ()
    %cst_15 = arith.constant dense<0xFF800000> : vector<1x64xf32>
    %25 = vector.multi_reduction <maximumf>, %24, %cst_15 [2] : vector<1x64x8xf32> to vector<1x64xf32>
    %26 = vector.shape_cast %25 : vector<1x64xf32> to vector<1x64x1xf32>
    %27 = vector.broadcast %26 : vector<1x64x1xf32> to vector<1x64x8xf32>
    %28 = arith.subf %24, %27 : vector<1x64x8xf32>
    %29 = math.exp %28 : vector<1x64x8xf32>
    %cst_16 = arith.constant dense<0.000000e+00> : vector<1x64xf32>
    %30 = vector.multi_reduction <add>, %29, %cst_16 [2] : vector<1x64x8xf32> to vector<1x64xf32>
    %31 = vector.shape_cast %30 : vector<1x64xf32> to vector<1x64x1xf32>
    %32 = tpu.reciprocal %31 {approx = true} : vector<1x64x1xf32> -> vector<1x64x1xf32>
    %33 = vector.broadcast %32 : vector<1x64x1xf32> to vector<1x64x8xf32>
    %34 = arith.mulf %29, %33 : vector<1x64x8xf32>
    "tpu.trace_start"() <{level = 10 : i32, message = "nhl,nlo->nho"}> : () -> ()
    %cst_17 = arith.constant dense<0.000000e+00> : vector<1x64x128xf32>
    %35 = tpu.matmul %34, %23, %cst_17 {dimension_numbers = #tpu.dot_dimension_numbers<[2], [1], [1], [2], [0, 0, 0, 1, 1, 2], [0], [0]>} : vector<1x64x8xf32>, vector<1x8x128xf32>, vector<1x64x128xf32> -> vector<1x64x128xf32>
    "tpu.trace_stop"() : () -> ()
    %36 = arith.addf %15, %35 : vector<1x64x128xf32>
    %37 = vector.extract_strided_slice %36 {offsets = [0, 0, 0], sizes = [1, 64, 16], strides = [1, 1, 1]} : vector<1x64x128xf32> to vector<1x64x16xf32>
    %c0_18 = arith.constant 0 : index
    %c0_19 = arith.constant 0 : index
    %c0_20 = arith.constant 0 : index
    %38 = vector.load %arg8[%c0_18, %c0_19, %c0_20] : memref<1x64x16xf32, #tpu.memory_space<vmem>>, vector<1x64x16xf32>
    tpu.vector_store %arg8[%c0_18, %c0_19, %c0_20], %37 {strides = array<i32>} : memref<1x64x16xf32, #tpu.memory_space<vmem>>, vector<1x64x16xf32>,
    %cst_21 = arith.constant dense<0.000000e+00> : vector<1x16xf32>
    %39 = vector.multi_reduction <add>, %37, %cst_21 [1] : vector<1x64x16xf32> to vector<1x16xf32>
    %40 = vector.shape_cast %39 : vector<1x16xf32> to vector<1x1x16xf32>
    %41 = vector.shape_cast %40 : vector<1x1x16xf32> to vector<1x1x1x16xf32>
    %c0_22 = arith.constant 0 : index
    %c0_23 = arith.constant 0 : index
    %c0_24 = arith.constant 0 : index
    %c0_25 = arith.constant 0 : index
    %42 = vector.load %arg9[%c0_22, %c0_23, %c0_24, %c0_25] : memref<1x1x1x16xf32, #tpu.memory_space<vmem>>, vector<1x1x1x16xf32>
    tpu.vector_store %arg9[%c0_22, %c0_23, %c0_24, %c0_25], %41 {strides = array<i32>} : memref<1x1x1x16xf32, #tpu.memory_space<vmem>>, vector<1x1x1x16xf32>,
    %43 = arith.mulf %37, %37 : vector<1x64x16xf32>
    %cst_26 = arith.constant dense<0.000000e+00> : vector<1x16xf32>
    %44 = vector.multi_reduction <add>, %43, %cst_26 [1] : vector<1x64x16xf32> to vector<1x16xf32>
    %45 = vector.shape_cast %44 : vector<1x16xf32> to vector<1x1x16xf32>
    %46 = vector.shape_cast %45 : vector<1x1x16xf32> to vector<1x1x1x16xf32>
    %c0_27 = arith.constant 0 : index
    %c0_28 = arith.constant 0 : index
    %c0_29 = arith.constant 0 : index
    %c0_30 = arith.constant 0 : index
    %47 = vector.load %arg10[%c0_27, %c0_28, %c0_29, %c0_30] : memref<1x1x1x16xf32, #tpu.memory_space<vmem>>, vector<1x1x1x16xf32>
    tpu.vector_store %arg10[%c0_27, %c0_28, %c0_29, %c0_30], %46 {strides = array<i32>} : memref<1x1x1x16xf32, #tpu.memory_space<vmem>>, vector<1x1x1x16xf32>,
    return
  }
  func.func @transform_0(%arg0: i32, %arg1: i32) -> (i32, i32, i32) {
    %c0_i32 = arith.constant 0 : i32
    %c0_i32_0 = arith.constant 0 : i32
    return %arg0, %arg1, %c0_i32 : i32, i32, i32
  }
  func.func @transform_1(%arg0: i32, %arg1: i32) -> (i32, i32, i32) {
    %c0_i32 = arith.constant 0 : i32
    %c0_i32_0 = arith.constant 0 : i32
    %c0_i32_1 = arith.constant 0 : i32
    return %arg0, %c0_i32, %c0_i32_0 : i32, i32, i32
  }
  func.func @transform_2(%arg0: i32, %arg1: i32) -> (i32, i32) {
    %c0_i32 = arith.constant 0 : i32
    %c0_i32_0 = arith.constant 0 : i32
    %c0_i32_1 = arith.constant 0 : i32
    return %c0_i32, %c0_i32_0 : i32, i32
  }
  func.func @transform_3(%arg0: i32, %arg1: i32) -> (i32, i32) {
    %c0_i32 = arith.constant 0 : i32
    %c0_i32_0 = arith.constant 0 : i32
    %c0_i32_1 = arith.constant 0 : i32
    return %c0_i32, %c0_i32_0 : i32, i32
  }
  func.func @transform_4(%arg0: i32, %arg1: i32) -> (i32, i32) {
    %c0_i32 = arith.constant 0 : i32
    %c0_i32_0 = arith.constant 0 : i32
    %c0_i32_1 = arith.constant 0 : i32
    return %c0_i32, %c0_i32_0 : i32, i32
  }
  func.func @transform_5(%arg0: i32, %arg1: i32) -> (i32, i32) {
    %c0_i32 = arith.constant 0 : i32
    %c0_i32_0 = arith.constant 0 : i32
    %c0_i32_1 = arith.constant 0 : i32
    return %c0_i32, %c0_i32_0 : i32, i32
  }
  func.func @transform_6(%arg0: i32, %arg1: i32) -> (i32, i32, i32) {
    %c0_i32 = arith.constant 0 : i32
    %c0_i32_0 = arith.constant 0 : i32
    return %arg0, %arg1, %c0_i32 : i32, i32, i32
  }
  func.func @transform_7(%arg0: i32, %arg1: i32) -> (i32, i32, i32, i32) {
    %c0_i32 = arith.constant 0 : i32
    %c0_i32_0 = arith.constant 0 : i32
    %c0_i32_1 = arith.constant 0 : i32
    return %arg0, %arg1, %c0_i32, %c0_i32_0 : i32, i32, i32, i32
  }
  func.func @transform_8(%arg0: i32, %arg1: i32) -> (i32, i32, i32, i32) {
    %c0_i32 = arith.constant 0 : i32
    %c0_i32_0 = arith.constant 0 : i32
    %c0_i32_1 = arith.constant 0 : i32
    return %arg0, %arg1, %c0_i32, %c0_i32_0 : i32, i32, i32, i32
  }
}

</mosaic_0001>

<llo_original>
// kernel: tpu_custom_call.1
$region0: #{tpu_custom_call.1}
  #allocation0 [shape = 'u32[]', space=smem, size = 0x4, offset = 0x4, fixed_abs, tag = 'smem constant byte address 0x4 - core index']
  #allocation1 [shape = 'u32[144,128]{1,0:T(1,128)}', space=vmem, size = 0x12000, scoped, tag = 'internal scratch']
  %s0 = inlined_call_operand.vmem [shape: f32[2,64,32], index: 0, kind: input, shape index: {}]
  %s1 = inlined_call_operand.vmem [shape: f32[2,8,8], index: 1, kind: input, shape index: {}]
  %s2 = inlined_call_operand.vmem [shape: f32[32,256], index: 2, kind: input, shape index: {}]
  %s3 = inlined_call_operand.vmem [shape: f32[8,256], index: 3, kind: input, shape index: {}]
  %s4 = inlined_call_operand.vmem [shape: f32[1,128], index: 4, kind: input, shape index: {}]
  %s5 = inlined_call_operand.vmem [shape: f32[1,128], index: 5, kind: input, shape index: {}]
  %s6 = inlined_call_operand.vmem [shape: f32[2,64,16], index: 6, kind: output, shape index: {0}]
  %s7 = inlined_call_operand.hbm [shape: f32[2,1,1,16], index: 7, kind: output, shape index: {1}]
  %s8 = inlined_call_operand.hbm [shape: f32[2,1,1,16], index: 8, kind: output, shape index: {2}]
  %9 = xla_tuple %s6, %s7, %s8
  %s10 = sld [smem:[#allocation0]]
  $region73: #{tpu_custom_call.1} parent=0
    _
  %s12 = ssub.s32 1, %s10
  %s13 = scalar_select 0, %s12, %s10
  $region1: #{tpu_custom_call.1} parent=0
    #allocation2 [shape = 'u8[1024]{0}', space=vmem, size = 0x400, scoped, tag = 'output window, operand 1']
    #allocation3 [shape = 's32[2]{0}', space=sflag, size = 0x8, scoped, tag = 'scoped memory for tpu_custom_call.1']
    #allocation4 [shape = 'u8[1024]{0}', space=vmem, size = 0x400, scoped, tag = 'output window, operand 2']
    #allocation5 [shape = 's32[2]{0}', space=sflag, size = 0x8, scoped, tag = 'scoped memory for tpu_custom_call.1']
    %14 = vsyncpa [#allocation3], 0
    %s15 = scalar_lea.sflag [#allocation3], 1
    %16 = vsyncpa %s15, 0
    %17 = vsyncpa [#allocation5], 0
    %s18 = scalar_lea.sflag [#allocation5], 1
    %19 = vsyncpa %s18, 0
    loop: start=0, step=1, limit=4
    $region2: #{tpu_custom_call.1} parent=1 // loop_pre_header
      _
    $region3: #{tpu_custom_call.1} parent=1 // loop_header
      %s21 = sphi 0, %s25
      %p22 = scmp.ge.s32.totalorder %s21, 4
      %s28 = sphi 0, %s40
      %s29 = sphi 0, %s36
      %s30 = sphi 0, %s28
      %s31 = sphi 0, %s29
      %s32 = sphi 0, %s30
      %s33 = sphi 0, %s31
      %s45 = sphi 0, %s47
      %s48 = sphi 0, %s45
      %s49 = sphi 0, %s48
      %s65 = sphi 0, %s49
      %s71 = sphi 0, %s73
      %s74 = sphi 0, %s71
      %s75 = sphi 0, %s74
      %s91 = sphi 0, %s75
      %s95 = sphi 0, %s95
      %s97 = sphi 0, %s95
      %s98 = sphi 0, %s97
      %s112 = sphi 0, %s98
      %s116 = sphi 0, %s116
      %s118 = sphi 0, %s116
      %s119 = sphi 0, %s118
      %s133 = sphi 0, %s119
      %s137 = sphi 0, %s137
      %s139 = sphi 0, %s137
      %s140 = sphi 0, %s139
      %s154 = sphi 0, %s140
      %s158 = sphi 0, %s158
      %s160 = sphi 0, %s158
      %s161 = sphi 0, %s160
      %s175 = sphi 0, %s161
      %s183 = sphi 0, %s185
      %s186 = sphi 0, %s183
      %s187 = sphi 0, %s186
      %s203 = sphi 0, %s187
      %s211 = sphi 0, %s213
      %s214 = sphi 0, %s211
      %s215 = sphi 0, %s214
      %s231 = sphi 0, %s215
      %s239 = sphi 0, %s241
      %s242 = sphi 0, %s239
      %s243 = sphi 0, %s242
      %s259 = sphi 0, %s243
    $region4: #{tpu_custom_call.1} parent=1 // loop_header_branch
      %24 = sbr.rel (%p22) target = $region8
    $region5: #{tpu_custom_call.1} parent=1 // loop_body
      %s26 = ssub.s32 %s21, 1
      %s27 = ssub.s32 %s21, 2
      %s34 = sadd.s32 1, %s29
      %p35 = scmp.ge.s32.totalorder %s34, 1
      %s36 = scalar_select %p35, 0, %s34
      %s37 = sadd.s32 1, %s28
      %s38 = scalar_select %p35, %s37, %s28
      %p39 = scmp.ge.s32.totalorder %s38, 2
      %s40 = scalar_select %p39, 0, %s38
      %s41 = ssub.s32 %s28, %s40
      %s42 = ssub.s32 %s29, %s36
      %s43 = sor.u32 %s41, %s42
      %p44 = scmp.eq.s32.totalorder %s43, 0
      %s46 = sadd.s32 %s45, 1
      %s47 = scalar_select %p44, %s45, %s46
      %p50 = pneg %p44
      %p51 = scmp.eq.s32.totalorder %s21, 1
      %p52 = por %p50, %p51
      %p53 = scmp.ne.s32.totalorder %s45, %s48
      %p54 = scmp.eq.s32.totalorder %s21, 0
      %p55 = por %p53, %p54
      %p56 = scmp.ne.s32.totalorder %s45, %s48
      %p57 = scmp.eq.s32.totalorder %s26, 1
      %p58 = por %p56, %p57
      %p59 = scmp.ne.s32.totalorder %s48, %s49
      %p60 = scmp.eq.s32.totalorder %s26, 0
      %p61 = por %p59, %p60
      %p62 = scmp.ne.s32.totalorder %s48, %s49
      %p63 = scmp.eq.s32.totalorder %s27, 1
      %p64 = por %p62, %p63
      %p66 = scmp.ne.s32.totalorder %s49, %s65
      %p67 = scmp.eq.s32.totalorder %s27, 0
      %p68 = por %p66, %p67
      %s69 = ssub.s32 %s28, %s40
      %p70 = scmp.eq.s32.totalorder %s69, 0
      %s72 = sadd.s32 %s71, 1
      %s73 = scalar_select %p70, %s71, %s72
      %p76 = pneg %p70
      %p77 = scmp.eq.s32.totalorder %s21, 1
      %p78 = por %p76, %p77
      %p79 = scmp.ne.s32.totalorder %s71, %s74
      %p80 = scmp.eq.s32.totalorder %s21, 0
      %p81 = por %p79, %p80
      %p82 = scmp.ne.s32.totalorder %s71, %s74
      %p83 = scmp.eq.s32.totalorder %s26, 1
      %p84 = por %p82, %p83
      %p85 = scmp.ne.s32.totalorder %s74, %s75
      %p86 = scmp.eq.s32.totalorder %s26, 0
      %p87 = por %p85, %p86
      %p88 = scmp.ne.s32.totalorder %s74, %s75
      %p89 = scmp.eq.s32.totalorder %s27, 1
      %p90 = por %p88, %p89
      %p92 = scmp.ne.s32.totalorder %s75, %s91
      %p93 = scmp.eq.s32.totalorder %s27, 0
      %p94 = por %p92, %p93
      %s96 = sadd.s32 %s95, 1
      %p99 = scmp.eq.s32.totalorder %s21, 1
      %p100 = scmp.ne.s32.totalorder %s95, %s97
      %p101 = scmp.eq.s32.totalorder %s21, 0
      %p102 = por %p100, %p101
      %p103 = scmp.ne.s32.totalorder %s95, %s97
      %p104 = scmp.eq.s32.totalorder %s26, 1
      %p105 = por %p103, %p104
      %p106 = scmp.ne.s32.totalorder %s97, %s98
      %p107 = scmp.eq.s32.totalorder %s26, 0
      %p108 = por %p106, %p107
      %p109 = scmp.ne.s32.totalorder %s97, %s98
      %p110 = scmp.eq.s32.totalorder %s27, 1
      %p111 = por %p109, %p110
      %p113 = scmp.ne.s32.totalorder %s98, %s112
      %p114 = scmp.eq.s32.totalorder %s27, 0
      %p115 = por %p113, %p114
      %s117 = sadd.s32 %s116, 1
      %p120 = scmp.eq.s32.totalorder %s21, 1
      %p121 = scmp.ne.s32.totalorder %s116, %s118
      %p122 = scmp.eq.s32.totalorder %s21, 0
      %p123 = por %p121, %p122
      %p124 = scmp.ne.s32.totalorder %s116, %s118
      %p125 = scmp.eq.s32.totalorder %s26, 1
      %p126 = por %p124, %p125
      %p127 = scmp.ne.s32.totalorder %s118, %s119
      %p128 = scmp.eq.s32.totalorder %s26, 0
      %p129 = por %p127, %p128
      %p130 = scmp.ne.s32.totalorder %s118, %s119
      %p131 = scmp.eq.s32.totalorder %s27, 1
      %p132 = por %p130, %p131
      %p134 = scmp.ne.s32.totalorder %s119, %s133
      %p135 = scmp.eq.s32.totalorder %s27, 0
      %p136 = por %p134, %p135
      %s138 = sadd.s32 %s137, 1
      %p141 = scmp.eq.s32.totalorder %s21, 1
      %p142 = scmp.ne.s32.totalorder %s137, %s139
      %p143 = scmp.eq.s32.totalorder %s21, 0
      %p144 = por %p142, %p143
      %p145 = scmp.ne.s32.totalorder %s137, %s139
      %p146 = scmp.eq.s32.totalorder %s26, 1
      %p147 = por %p145, %p146
      %p148 = scmp.ne.s32.totalorder %s139, %s140
      %p149 = scmp.eq.s32.totalorder %s26, 0
      %p150 = por %p148, %p149
      %p151 = scmp.ne.s32.totalorder %s139, %s140
      %p152 = scmp.eq.s32.totalorder %s27, 1
      %p153 = por %p151, %p152
      %p155 = scmp.ne.s32.totalorder %s140, %s154
      %p156 = scmp.eq.s32.totalorder %s27, 0
      %p157 = por %p155, %p156
      %s159 = sadd.s32 %s158, 1
      %p162 = scmp.eq.s32.totalorder %s21, 1
      %p163 = scmp.ne.s32.totalorder %s158, %s160
      %p164 = scmp.eq.s32.totalorder %s21, 0
      %p165 = por %p163, %p164
      %p166 = scmp.ne.s32.totalorder %s158, %s160
      %p167 = scmp.eq.s32.totalorder %s26, 1
      %p168 = por %p166, %p167
      %p169 = scmp.ne.s32.totalorder %s160, %s161
      %p170 = scmp.eq.s32.totalorder %s26, 0
      %p171 = por %p169, %p170
      %p172 = scmp.ne.s32.totalorder %s160, %s161
      %p173 = scmp.eq.s32.totalorder %s27, 1
      %p174 = por %p172, %p173
      %p176 = scmp.ne.s32.totalorder %s161, %s175
      %p177 = scmp.eq.s32.totalorder %s27, 0
      %p178 = por %p176, %p177
      %s179 = ssub.s32 %s28, %s40
      %s180 = ssub.s32 %s29, %s36
      %s181 = sor.u32 %s179, %s180
      %p182 = scmp.eq.s32.totalorder %s181, 0
      %s184 = sadd.s32 %s183, 1
      %s185 = scalar_select %p182, %s183, %s184
      %p188 = pneg %p182
      %p189 = scmp.eq.s32.totalorder %s21, 1
      %p190 = por %p188, %p189
      %p191 = scmp.ne.s32.totalorder %s183, %s186
      %p192 = scmp.eq.s32.totalorder %s21, 0
      %p193 = por %p191, %p192
      %p194 = scmp.ne.s32.totalorder %s183, %s186
      %p195 = scmp.eq.s32.totalorder %s26, 1
      %p196 = por %p194, %p195
      %p197 = scmp.ne.s32.totalorder %s186, %s187
      %p198 = scmp.eq.s32.totalorder %s26, 0
      %p199 = por %p197, %p198
      %p200 = scmp.ne.s32.totalorder %s186, %s187
      %p201 = scmp.eq.s32.totalorder %s27, 1
      %p202 = por %p200, %p201
      %p204 = scmp.ne.s32.totalorder %s187, %s203
      %p205 = scmp.eq.s32.totalorder %s27, 0
      %p206 = por %p204, %p205
      %s207 = ssub.s32 %s28, %s40
      %s208 = ssub.s32 %s29, %s36
      %s209 = sor.u32 %s207, %s208
      %p210 = scmp.eq.s32.totalorder %s209, 0
      %s212 = sadd.s32 %s211, 1
      %s213 = scalar_select %p210, %s211, %s212
      %p216 = pneg %p210
      %p217 = scmp.eq.s32.totalorder %s21, 1
      %p218 = por %p216, %p217
      %p219 = scmp.ne.s32.totalorder %s211, %s214
      %p220 = scmp.eq.s32.totalorder %s21, 0
      %p221 = por %p219, %p220
      %p222 = scmp.ne.s32.totalorder %s211, %s214
      %p223 = scmp.eq.s32.totalorder %s26, 1
      %p224 = por %p222, %p223
      %p225 = scmp.ne.s32.totalorder %s214, %s215
      %p226 = scmp.eq.s32.totalorder %s26, 0
      %p227 = por %p225, %p226
      %p228 = scmp.ne.s32.totalorder %s214, %s215
      %p229 = scmp.eq.s32.totalorder %s27, 1
      %p230 = por %p228, %p229
      %p232 = scmp.ne.s32.totalorder %s215, %s231
      %p233 = scmp.eq.s32.totalorder %s27, 0
      %p234 = por %p232, %p233
      %s235 = ssub.s32 %s28, %s40
      %s236 = ssub.s32 %s29, %s36
      %s237 = sor.u32 %s235, %s236
      %p238 = scmp.eq.s32.totalorder %s237, 0
      %s240 = sadd.s32 %s239, 1
      %s241 = scalar_select %p238, %s239, %s240
      %p244 = pneg %p238
      %p245 = scmp.eq.s32.totalorder %s21, 1
      %p246 = por %p244, %p245
      %p247 = scmp.ne.s32.totalorder %s239, %s242
      %p248 = scmp.eq.s32.totalorder %s21, 0
      %p249 = por %p247, %p248
      %p250 = scmp.ne.s32.totalorder %s239, %s242
      %p251 = scmp.eq.s32.totalorder %s26, 1
      %p252 = por %p250, %p251
      %p253 = scmp.ne.s32.totalorder %s242, %s243
      %p254 = scmp.eq.s32.totalorder %s26, 0
      %p255 = por %p253, %p254
      %p256 = scmp.ne.s32.totalorder %s242, %s243
      %p257 = scmp.eq.s32.totalorder %s27, 1
      %p258 = por %p256, %p257
      %p260 = scmp.ne.s32.totalorder %s243, %s259
      %p261 = scmp.eq.s32.totalorder %s27, 0
      %p262 = por %p260, %p261
      %p263 = scmp.le.s32.totalorder 1, %s21
      %p264 = scmp.lt.s32.totalorder %s21, 3
      %p265 = pnand %p263, %p264
      %p266 = pneg %p265
      // Predicated region
      $region9: #{tpu_custom_call.1} parent=5 // pred_check
        _
      $region10: #{tpu_custom_call.1} parent=5 // pred_check_branch
        %268 = sbr.rel (%p265) target = $region12
      $region11: #{tpu_custom_call.1} parent=5 // pred_region
        %s269 = ssub.s32 %s21, 1
        // Predicated region
        $region13: #{tpu_custom_call.1} parent=11 // pred_check
          %p270 = pneg %p108
        $region14: #{tpu_custom_call.1} parent=11 // pred_check_branch
          %272 = sbr.rel (%p270) target = $region16
        $region15: #{tpu_custom_call.1} parent=11 // pred_region
          _
        $region16: #{tpu_custom_call.1} parent=11 // pred_fallthru
          _
        // Predicated region
        $region17: #{tpu_custom_call.1} parent=11 // pred_check
          %p273 = pneg %p129
        $region18: #{tpu_custom_call.1} parent=11 // pred_check_branch
          %275 = sbr.rel (%p273) target = $region20
        $region19: #{tpu_custom_call.1} parent=11 // pred_region
          _
        $region20: #{tpu_custom_call.1} parent=11 // pred_fallthru
          _
        // Predicated region
        $region21: #{tpu_custom_call.1} parent=11 // pred_check
          %p276 = pneg %p150
        $region22: #{tpu_custom_call.1} parent=11 // pred_check_branch
          %278 = sbr.rel (%p276) target = $region24
        $region23: #{tpu_custom_call.1} parent=11 // pred_region
          _
        $region24: #{tpu_custom_call.1} parent=11 // pred_fallthru
          _
        // Predicated region
        $region25: #{tpu_custom_call.1} parent=11 // pred_check
          %p279 = pneg %p171
        $region26: #{tpu_custom_call.1} parent=11 // pred_check_branch
          %281 = sbr.rel (%p279) target = $region28
        $region27: #{tpu_custom_call.1} parent=11 // pred_region
          _
        $region28: #{tpu_custom_call.1} parent=11 // pred_fallthru
          _
      $region12: #{tpu_custom_call.1} parent=5 // pred_fallthru
        _
      %p282 = scmp.lt.s32.totalorder %s21, 2
      // Predicated region
      $region29: #{tpu_custom_call.1} parent=5 // pred_check
        %p283 = pneg %p282
      $region30: #{tpu_custom_call.1} parent=5 // pred_check_branch
        %285 = sbr.rel (%p283) target = $region32
      $region31: #{tpu_custom_call.1} parent=5 // pred_region
        // Predicated region
        $region33: #{tpu_custom_call.1} parent=31 // pred_check
          %p286 = pneg %p55
        $region34: #{tpu_custom_call.1} parent=31 // pred_check_branch
          %288 = sbr.rel (%p286) target = $region36
        $region35: #{tpu_custom_call.1} parent=31 // pred_region
          %s289 = smul.u32 8, %s29
          %p290 = scmp.lt.s32.totalorder %s28, 1
          %s291 = scalar_select %p290, %s28, 1
          %p292 = scmp.lt.s32.totalorder %s289, 7
          %s293 = scalar_select %p292, %s289, 7
          %s294 = smul.addr %s291, 8
          %s295 = sadd.s32 %s293, %s294
          %s296 = smul.addr %s295, 8
          %s297 = scalar_lea.vmem %s0, %s296
          %s298 = smul.u32 8, %s29
        $region36: #{tpu_custom_call.1} parent=31 // pred_fallthru
          _
        // Predicated region
        $region37: #{tpu_custom_call.1} parent=31 // pred_check
          %p299 = pneg %p81
        $region38: #{tpu_custom_call.1} parent=31 // pred_check_branch
          %301 = sbr.rel (%p299) target = $region40
        $region39: #{tpu_custom_call.1} parent=31 // pred_region
          %p302 = scmp.lt.s32.totalorder %s28, 1
          %s303 = scalar_select %p302, %s28, 1
          %s304 = smul.addr %s303, 8
          %s305 = scalar_lea.vmem %s1, %s304
        $region40: #{tpu_custom_call.1} parent=31 // pred_fallthru
          _
      $region32: #{tpu_custom_call.1} parent=5 // pred_fallthru
        _
      %p306 = scmp.le.s32.totalorder 1, %s21
      %p307 = scmp.lt.s32.totalorder %s21, 3
      %p308 = pnand %p306, %p307
      %p309 = pneg %p308
      // Predicated region
      $region41: #{tpu_custom_call.1} parent=5 // pred_check
        _
      $region42: #{tpu_custom_call.1} parent=5 // pred_check_branch
        %311 = sbr.rel (%p308) target = $region44
      $region43: #{tpu_custom_call.1} parent=5 // pred_region
        %s312 = ssub.s32 %s21, 1
        %s313 = smul.u32 8, %s31
        %p314 = scmp.lt.s32.totalorder %s30, 1
        %s315 = scalar_select %p314, %s30, 1
        %p316 = scmp.lt.s32.totalorder %s313, 7
        %s317 = scalar_select %p316, %s313, 7
        %s318 = smul.addr %s315, 8
        %s319 = sadd.s32 %s317, %s318
        %s320 = smul.addr %s319, 8
        %s321 = scalar_lea.vmem %s0, %s320
        %p322 = pneg %p61
        %p323 = pneg %p58
        %p324 = scmp.lt.s32.totalorder %s30, 1
        %s325 = scalar_select %p324, %s30, 1
        %s326 = smul.addr %s325, 8
        %s327 = scalar_lea.vmem %s1, %s326
        %p328 = pneg %p87
        %p329 = pneg %p84
        %p330 = pneg %p108
        %p331 = pneg %p105
        %p332 = pneg %p129
        %p333 = pneg %p126
        %p334 = pneg %p150
        %p335 = pneg %p147
        %p336 = pneg %p171
        %p337 = pneg %p168
        %p338 = pneg %p199
        %p339 = pneg %p196
        %s340 = smul.u32 8, %s31
        %p341 = scmp.lt.s32.totalorder %s30, 1
        %s342 = scalar_select %p341, %s30, 1
        %p343 = scmp.lt.s32.totalorder %s340, 7
        %s344 = scalar_select %p343, %s340, 7
        %s345 = smul.addr %s342, 8
        %s346 = sadd.s32 %s344, %s345
        %s347 = smul.addr %s346, 8
        %s348 = scalar_lea.vmem %s6, %s347
        %p349 = pneg %p227
        %p350 = pneg %p224
        %s351 = sand.u32 %s214, 1
        %s352 = scalar_lea.sflag [#allocation3], %s351
        %s353 = sand.u32 %s214, 1
        %s354 = scalar_lea.vmem [#allocation2], %s353
        %p355 = pneg %p255
        %p356 = pneg %p252
        %s357 = sand.u32 %s242, 1
        %s358 = scalar_lea.sflag [#allocation5], %s357
        %s359 = sand.u32 %s242, 1
        %s360 = scalar_lea.vmem [#allocation4], %s359
        %s361 = smul.u32 8, %s31
        %p362 = scmp.lt.s32.totalorder %s30, 1
        %s363 = scalar_select %p362, %s30, 1
        %p364 = scmp.lt.s32.totalorder %s361, 7
        %s365 = scalar_select %p364, %s361, 7
        %s366 = smul.addr %s363, 8
        %s367 = sadd.s32 %s365, %s366
        %s368 = smul.addr %s367, 8
        %s369 = scalar_lea.vmem %s0, %s368
        %s370 = smul.u32 8, %s31
        %p371 = scmp.lt.s32.totalorder %s30, 1
        %s372 = scalar_select %p371, %s30, 1
        %s373 = smul.addr %s372, 8
        %s374 = scalar_lea.vmem %s1, %s373
        %s375 = smul.u32 8, %s31
        %p376 = scmp.lt.s32.totalorder %s30, 1
        %s377 = scalar_select %p376, %s30, 1
        %p378 = scmp.lt.s32.totalorder %s375, 7
        %s379 = scalar_select %p378, %s375, 7
        %s380 = smul.addr %s377, 8
        %s381 = sadd.s32 %s379, %s380
        %s382 = smul.addr %s381, 8
        %s383 = scalar_lea.vmem %s6, %s382
        %s384 = smul.u32 8, %s31
        %v385 = vld [vmem:[%s369] sm:$0xff]
        %v386 = vld [vmem:[%s369 + $0x8] sm:$0xff]
        %v387 = vld [vmem:[%s369 + $0x10] sm:$0xff]
        %v388 = vld [vmem:[%s369 + $0x18] sm:$0xff]
        %v389 = vld [vmem:[%s369 + $0x20] sm:$0xff]
        %v390 = vld [vmem:[%s369 + $0x28] sm:$0xff]
        %v391 = vld [vmem:[%s369 + $0x30] sm:$0xff]
        %v392 = vld [vmem:[%s369 + $0x38] sm:$0xff]
        %v393 = vld [vmem:[%s374] sm:$0xff]
        %v394 = vld [vmem:[%s2] sm:$0xff]
        %v395 = vld [vmem:[%s2 + $0x8] sm:$0xff]
        %v396 = vld [vmem:[%s2 + $0x10] sm:$0xff]
        %v397 = vld [vmem:[%s2 + $0x18] sm:$0xff]
        %v398 = vld [vmem:[%s2 + $0x20] sm:$0xff]
        %v399 = vld [vmem:[%s2 + $0x28] sm:$0xff]
        %v400 = vld [vmem:[%s2 + $0x30] sm:$0xff]
        %v401 = vld [vmem:[%s2 + $0x38] sm:$0xff]
        %vm402 = vcmask 261120
        %v404 = vsel %vm402, %v385, 0
        %v407 = vsel %vm402, %v386, 0
        %v410 = vsel %vm402, %v387, 0
        %v413 = vsel %vm402, %v388, 0
        %v416 = vsel %vm402, %v389, 0
        %v419 = vsel %vm402, %v390, 0
        %v422 = vsel %vm402, %v391, 0
        %v425 = vsel %vm402, %v392, 0
        %427 = vmatprep.subr.mxu0 0.0
        %428 = vmatpush1.msra.mxu0 0.0
        %429 = vmatprep.subr.mxu0 0.0
        %430 = vmatpush1.msra.mxu0 0.0
        %431 = vmatprep.subr.mxu0 0.0
        %432 = vmatpush1.msra.mxu0 0.0
        %433 = vmatprep.subr.mxu0 0.0
        %434 = vmatpush1.msra.mxu0 0.0
        %435 = vmatprep.subr.mxu0 0.0
        %436 = vmatpush1.msra.mxu0 0.0
        %437 = vmatprep.subr.mxu0 0.0
        %438 = vmatpush1.msra.mxu0 0.0
        %439 = vmatprep.subr.mxu0 0.0
        %440 = vmatpush1.msra.mxu0 0.0
        %441 = vmatprep.subr.mxu0 0.0
        %442 = vmatpush1.msra.mxu0 0.0
        %443 = vmatprep.subr.mxu0 0.0
        %444 = vmatpush1.msra.mxu0 0.0
        %445 = vmatprep.subr.mxu0 0.0
        %446 = vmatpush1.msra.mxu0 0.0
        %447 = vmatprep.subr.mxu0 0.0
        %448 = vmatpush1.msra.mxu0 0.0
        %449 = vmatprep.subr.mxu0 0.0
        %450 = vmatpush1.msra.mxu0 0.0
        %451 = vmatprep.subr.mxu0 %v401
        %452 = vmatpush1.msra.mxu0 %v400
        %453 = vmatprep.subr.mxu0 %v399
        %454 = vmatpush1.msra.mxu0 %v398
        %455 = vmatprep.subr.mxu0 %v397
        %456 = vmatpush1.msra.mxu0 %v396
        %457 = vmatprep.subr.mxu0 %v395
        %458 = vmatpush1.msra.mxu0 %v394
        %459 = vmatprep.subr.mxu0 0.0
        %460 = vmatpush2.msra.mxu0 0.0
        %461 = vmatprep.subr.mxu0 0.0
        %462 = vmatpush2.msra.mxu0 0.0
        %463 = vmatprep.subr.mxu0 0.0
        %464 = vmatpush2.msra.mxu0 0.0
        %465 = vmatprep.subr.mxu0 0.0
        %466 = vmatpush2.msra.mxu0 0.0
        %467 = vmatprep.subr.mxu0 0.0
        %468 = vmatpush2.msra.mxu0 0.0
        %469 = vmatprep.subr.mxu0 0.0
        %470 = vmatpush2.msra.mxu0 0.0
        %471 = vmatprep.subr.mxu0 0.0
        %472 = vmatpush2.msra.mxu0 0.0
        %473 = vmatprep.subr.mxu0 0.0
        %474 = vmatpush2.msra.mxu0 0.0
        %475 = vmatprep.subr.mxu0 0.0
        %476 = vmatpush2.msra.mxu0 0.0
        %477 = vmatprep.subr.mxu0 0.0
        %478 = vmatpush2.msra.mxu0 0.0
        %479 = vmatprep.subr.mxu0 0.0
        %480 = vmatpush2.msra.mxu0 0.0
        %481 = vmatprep.subr.mxu0 0.0
        %482 = vmatpush2.msra.mxu0 0.0
        %483 = vmatprep.subr.mxu0 0.0
        %484 = vmatpush2.msra.mxu0 0.0
        %485 = vmatprep.subr.mxu0 0.0
        %486 = vmatpush2.msra.mxu0 0.0
        %487 = vmatprep.subr.mxu0 0.0
        %488 = vmatpush2.msra.mxu0 0.0
        %489 = vmatprep.subr.mxu0 0.0
        %490 = vmatpush2.msra.mxu0 0.0
        %491 = vmatprep.mubr.f32.mxu0 0.0
        %492 = vmatmul.mubr.f32.gmra.mxu0 %v404
        %v493 = vpop.f32.mrf.mxu0
        %v494 = vadd.f32 0.0, %v493
        %v495 = vpop.f32.mrf.mxu0
        %v496 = vadd.f32 0.0, %v495
        %497 = vmatprep.mubr.f32.mxu0 0.0
        %498 = vmatmul.mubr.f32.gmra.mxu0 %v407
        %v499 = vpop.f32.mrf.mxu0
        %v500 = vadd.f32 0.0, %v499
        %v501 = vpop.f32.mrf.mxu0
        %v502 = vadd.f32 0.0, %v501
        %503 = vmatprep.mubr.f32.mxu0 0.0
        %504 = vmatmul.mubr.f32.gmra.mxu0 %v410
        %v505 = vpop.f32.mrf.mxu0
        %v506 = vadd.f32 0.0, %v505
        %v507 = vpop.f32.mrf.mxu0
        %v508 = vadd.f32 0.0, %v507
        %509 = vmatprep.mubr.f32.mxu0 0.0
        %510 = vmatmul.mubr.f32.gmra.mxu0 %v413
        %v511 = vpop.f32.mrf.mxu0
        %v512 = vadd.f32 0.0, %v511
        %v513 = vpop.f32.mrf.mxu0
        %v514 = vadd.f32 0.0, %v513
        %515 = vmatprep.mubr.f32.mxu0 0.0
        %516 = vmatmul.mubr.f32.gmra.mxu0 %v416
        %v517 = vpop.f32.mrf.mxu0
        %v518 = vadd.f32 0.0, %v517
        %v519 = vpop.f32.mrf.mxu0
        %v520 = vadd.f32 0.0, %v519
        %521 = vmatprep.mubr.f32.mxu0 0.0
        %522 = vmatmul.mubr.f32.gmra.mxu0 %v419
        %v523 = vpop.f32.mrf.mxu0
        %v524 = vadd.f32 0.0, %v523
        %v525 = vpop.f32.mrf.mxu0
        %v526 = vadd.f32 0.0, %v525
        %527 = vmatprep.mubr.f32.mxu0 0.0
        %528 = vmatmul.mubr.f32.gmra.mxu0 %v422
        %v529 = vpop.f32.mrf.mxu0
        %v530 = vadd.f32 0.0, %v529
        %v531 = vpop.f32.mrf.mxu0
        %v532 = vadd.f32 0.0, %v531
        %533 = vmatprep.mubr.f32.mxu0 0.0
        %534 = vmatmul.mubr.f32.gmra.mxu0 %v425
        %v535 = vpop.f32.mrf.mxu0
        %v536 = vadd.f32 0.0, %v535
        %v537 = vpop.f32.mrf.mxu0
        %v538 = vadd.f32 0.0, %v537
        %539 = vdwg.mxu0
        %v540 = vld [vmem:[%s3] sm:$0xff]
        %v541 = vld [vmem:[%s3 + $0x8] sm:$0xff]
        %vm542 = vcmask 64512
        %v544 = vsel %vm542, %v393, 0
        %546 = vmatprep.subr.mxu0 0.0
        %547 = vmatpush1.msra.mxu0 0.0
        %548 = vmatprep.subr.mxu0 0.0
        %549 = vmatpush1.msra.mxu0 0.0
        %550 = vmatprep.subr.mxu0 0.0
        %551 = vmatpush1.msra.mxu0 0.0
        %552 = vmatprep.subr.mxu0 0.0
        %553 = vmatpush1.msra.mxu0 0.0
        %554 = vmatprep.subr.mxu0 0.0
        %555 = vmatpush1.msra.mxu0 0.0
        %556 = vmatprep.subr.mxu0 0.0
        %557 = vmatpush1.msra.mxu0 0.0
        %558 = vmatprep.subr.mxu0 0.0
        %559 = vmatpush1.msra.mxu0 0.0
        %560 = vmatprep.subr.mxu0 0.0
        %561 = vmatpush1.msra.mxu0 0.0
        %562 = vmatprep.subr.mxu0 0.0
        %563 = vmatpush1.msra.mxu0 0.0
        %564 = vmatprep.subr.mxu0 0.0
        %565 = vmatpush1.msra.mxu0 0.0
        %566 = vmatprep.subr.mxu0 0.0
        %567 = vmatpush1.msra.mxu0 0.0
        %568 = vmatprep.subr.mxu0 0.0
        %569 = vmatpush1.msra.mxu0 0.0
        %570 = vmatprep.subr.mxu0 0.0
        %571 = vmatpush1.msra.mxu0 0.0
        %572 = vmatprep.subr.mxu0 0.0
        %573 = vmatpush1.msra.mxu0 0.0
        %574 = vmatprep.subr.mxu0 0.0
        %575 = vmatpush1.msra.mxu0 0.0
        %576 = vmatprep.subr.mxu0 %v541
        %577 = vmatpush1.msra.mxu0 %v540
        %578 = vmatprep.subr.mxu0 0.0
        %579 = vmatpush2.msra.mxu0 0.0
        %580 = vmatprep.subr.mxu0 0.0
        %581 = vmatpush2.msra.mxu0 0.0
        %582 = vmatprep.subr.mxu0 0.0
        %583 = vmatpush2.msra.mxu0 0.0
        %584 = vmatprep.subr.mxu0 0.0
        %585 = vmatpush2.msra.mxu0 0.0
        %586 = vmatprep.subr.mxu0 0.0
        %587 = vmatpush2.msra.mxu0 0.0
        %588 = vmatprep.subr.mxu0 0.0
        %589 = vmatpush2.msra.mxu0 0.0
        %590 = vmatprep.subr.mxu0 0.0
        %591 = vmatpush2.msra.mxu0 0.0
        %592 = vmatprep.subr.mxu0 0.0
        %593 = vmatpush2.msra.mxu0 0.0
        %594 = vmatprep.subr.mxu0 0.0
        %595 = vmatpush2.msra.mxu0 0.0
        %596 = vmatprep.subr.mxu0 0.0
        %597 = vmatpush2.msra.mxu0 0.0
        %598 = vmatprep.subr.mxu0 0.0
        %599 = vmatpush2.msra.mxu0 0.0
        %600 = vmatprep.subr.mxu0 0.0
        %601 = vmatpush2.msra.mxu0 0.0
        %602 = vmatprep.subr.mxu0 0.0
        %603 = vmatpush2.msra.mxu0 0.0
        %604 = vmatprep.subr.mxu0 0.0
        %605 = vmatpush2.msra.mxu0 0.0
        %606 = vmatprep.subr.mxu0 0.0
        %607 = vmatpush2.msra.mxu0 0.0
        %608 = vmatprep.subr.mxu0 0.0
        %609 = vmatpush2.msra.mxu0 0.0
        %610 = vmatprep.mubr.f32.mxu0 0.0
        %611 = vmatmul.mubr.f32.gmra.mxu0 %v544
        %v612 = vpop.f32.mrf.mxu0
        %v613 = vadd.f32 0.0, %v612
        %v614 = vpop.f32.mrf.mxu0
        %v615 = vadd.f32 0.0, %v614
        %616 = vdwg.mxu0
        %v617 = vld [vmem:[%s5] sm:$0x1]
        %v619 = vlaneseq
        %v620 = vshrl.u32 %v619, 7
        %v621 = vsub.s32 0, %v620
        %v622 = vrot.slane %v617, %v621
        %v624 = vadd.f32 %v496, %v622
        %v625 = vadd.f32 %v502, %v622
        %v626 = vadd.f32 %v508, %v622
        %v627 = vadd.f32 %v514, %v622
        %v628 = vadd.f32 %v520, %v622
        %v629 = vadd.f32 %v526, %v622
        %v630 = vadd.f32 %v532, %v622
        %v631 = vadd.f32 %v538, %v622
        %v632 = vld [vmem:[%s4] sm:$0x1]
        %v634 = vlaneseq
        %v635 = vshrl.u32 %v634, 7
        %v636 = vsub.s32 0, %v635
        %v637 = vrot.slane %v632, %v636
        %v639 = vadd.f32 %v615, %v637
        %640 = vmatprep.subr.mxu0 0.0
        %641 = vmatpush1.xpose.msra.mxu0 0.0
        %642 = vmatprep.subr.mxu0 0.0
        %643 = vmatpush1.xpose.msra.mxu0 0.0
        %644 = vmatprep.subr.mxu0 0.0
        %645 = vmatpush1.xpose.msra.mxu0 0.0
        %646 = vmatprep.subr.mxu0 0.0
        %647 = vmatpush1.xpose.msra.mxu0 0.0
        %648 = vmatprep.subr.mxu0 0.0
        %649 = vmatpush1.xpose.msra.mxu0 0.0
        %650 = vmatprep.subr.mxu0 0.0
        %651 = vmatpush1.xpose.msra.mxu0 0.0
        %652 = vmatprep.subr.mxu0 0.0
        %653 = vmatpush1.xpose.msra.mxu0 0.0
        %654 = vmatprep.subr.mxu0 0.0
        %655 = vmatpush1.xpose.msra.mxu0 0.0
        %656 = vmatprep.subr.mxu0 0.0
        %657 = vmatpush1.xpose.msra.mxu0 0.0
        %658 = vmatprep.subr.mxu0 0.0
        %659 = vmatpush1.xpose.msra.mxu0 0.0
        %660 = vmatprep.subr.mxu0 0.0
        %661 = vmatpush1.xpose.msra.mxu0 0.0
        %662 = vmatprep.subr.mxu0 0.0
        %663 = vmatpush1.xpose.msra.mxu0 0.0
        %664 = vmatprep.subr.mxu0 0.0
        %665 = vmatpush1.xpose.msra.mxu0 0.0
        %666 = vmatprep.subr.mxu0 0.0
        %667 = vmatpush1.xpose.msra.mxu0 0.0
        %668 = vmatprep.subr.mxu0 0.0
        %669 = vmatpush1.xpose.msra.mxu0 0.0
        %670 = vmatprep.subr.mxu0 0.0
        %671 = vmatpush1.xpose.msra.mxu0 %v613
        %672 = vmatprep.subr.mxu0 0.0
        %673 = vmatpush2.xpose.msra.mxu0 0.0
        %674 = vmatprep.subr.mxu0 0.0
        %675 = vmatpush2.xpose.msra.mxu0 0.0
        %676 = vmatprep.subr.mxu0 0.0
        %677 = vmatpush2.xpose.msra.mxu0 0.0
        %678 = vmatprep.subr.mxu0 0.0
        %679 = vmatpush2.xpose.msra.mxu0 0.0
        %680 = vmatprep.subr.mxu0 0.0
        %681 = vmatpush2.xpose.msra.mxu0 0.0
        %682 = vmatprep.subr.mxu0 0.0
        %683 = vmatpush2.xpose.msra.mxu0 0.0
        %684 = vmatprep.subr.mxu0 0.0
        %685 = vmatpush2.xpose.msra.mxu0 0.0
        %686 = vmatprep.subr.mxu0 0.0
        %687 = vmatpush2.xpose.msra.mxu0 0.0
        %688 = vmatprep.subr.mxu0 0.0
        %689 = vmatpush2.xpose.msra.mxu0 0.0
        %690 = vmatprep.subr.mxu0 0.0
        %691 = vmatpush2.xpose.msra.mxu0 0.0
        %692 = vmatprep.subr.mxu0 0.0
        %693 = vmatpush2.xpose.msra.mxu0 0.0
        %694 = vmatprep.subr.mxu0 0.0
        %695 = vmatpush2.xpose.msra.mxu0 0.0
        %696 = vmatprep.subr.mxu0 0.0
        %697 = vmatpush2.xpose.msra.mxu0 0.0
        %698 = vmatprep.subr.mxu0 0.0
        %699 = vmatpush2.xpose.msra.mxu0 0.0
        %700 = vmatprep.subr.mxu0 0.0
        %701 = vmatpush2.xpose.msra.mxu0 0.0
        %702 = vmatprep.subr.mxu0 0.0
        %703 = vmatpush2.xpose.msra.mxu0 0.0
        %704 = vmatprep.mubr.f32.mxu0 0.0
        %705 = vmatmul.mubr.f32.gmra.mxu0 %v494
        %v706 = vpop.f32.mrf.mxu0
        %v707 = vadd.f32 0.0, %v706
        %v708 = vpop.f32.mrf.mxu0
        %709 = vmatprep.mubr.f32.mxu0 0.0
        %710 = vmatmul.mubr.f32.gmra.mxu0 %v500
        %v711 = vpop.f32.mrf.mxu0
        %v712 = vadd.f32 0.0, %v711
        %v713 = vpop.f32.mrf.mxu0
        %714 = vmatprep.mubr.f32.mxu0 0.0
        %715 = vmatmul.mubr.f32.gmra.mxu0 %v506
        %v716 = vpop.f32.mrf.mxu0
        %v717 = vadd.f32 0.0, %v716
        %v718 = vpop.f32.mrf.mxu0
        %719 = vmatprep.mubr.f32.mxu0 0.0
        %720 = vmatmul.mubr.f32.gmra.mxu0 %v512
        %v721 = vpop.f32.mrf.mxu0
        %v722 = vadd.f32 0.0, %v721
        %v723 = vpop.f32.mrf.mxu0
        %724 = vmatprep.mubr.f32.mxu0 0.0
        %725 = vmatmul.mubr.f32.gmra.mxu0 %v518
        %v726 = vpop.f32.mrf.mxu0
        %v727 = vadd.f32 0.0, %v726
        %v728 = vpop.f32.mrf.mxu0
        %729 = vmatprep.mubr.f32.mxu0 0.0
        %730 = vmatmul.mubr.f32.gmra.mxu0 %v524
        %v731 = vpop.f32.mrf.mxu0
        %v732 = vadd.f32 0.0, %v731
        %v733 = vpop.f32.mrf.mxu0
        %734 = vmatprep.mubr.f32.mxu0 0.0
        %735 = vmatmul.mubr.f32.gmra.mxu0 %v530
        %v736 = vpop.f32.mrf.mxu0
        %v737 = vadd.f32 0.0, %v736
        %v738 = vpop.f32.mrf.mxu0
        %739 = vmatprep.mubr.f32.mxu0 0.0
        %740 = vmatmul.mubr.f32.gmra.mxu0 %v536
        %v741 = vpop.f32.mrf.mxu0
        %v742 = vadd.f32 0.0, %v741
        %v743 = vpop.f32.mrf.mxu0
        %744 = vdwg.mxu0
        %v745 = vsel %vm542, %v707, -inf
        %746 = vmax.xlane.f32.xlu0 %v745
        %v747 = vpop.xlane.xlu0 %746
        %v748 = vsel %vm542, %v712, -inf
        %749 = vmax.xlane.f32.xlu0 %v748
        %v750 = vpop.xlane.xlu0 %749
        %v751 = vsel %vm542, %v717, -inf
        %752 = vmax.xlane.f32.xlu0 %v751
        %v753 = vpop.xlane.xlu0 %752
        %v754 = vsel %vm542, %v722, -inf
        %755 = vmax.xlane.f32.xlu0 %v754
        %v756 = vpop.xlane.xlu0 %755
        %v757 = vsel %vm542, %v727, -inf
        %758 = vmax.xlane.f32.xlu0 %v757
        %v759 = vpop.xlane.xlu0 %758
        %v760 = vsel %vm542, %v732, -inf
        %761 = vmax.xlane.f32.xlu0 %v760
        %v762 = vpop.xlane.xlu0 %761
        %v763 = vsel %vm542, %v737, -inf
        %764 = vmax.xlane.f32.xlu0 %v763
        %v765 = vpop.xlane.xlu0 %764
        %v766 = vsel %vm542, %v742, -inf
        %767 = vmax.xlane.f32.xlu0 %v766
        %v768 = vpop.xlane.xlu0 %767
        %v769 = vsub.f32 %v707, %v747
        %v770 = vsub.f32 %v712, %v750
        %v771 = vsub.f32 %v717, %v753
        %v772 = vsub.f32 %v722, %v756
        %v773 = vsub.f32 %v727, %v759
        %v774 = vsub.f32 %v732, %v762
        %v775 = vsub.f32 %v737, %v765
        %v776 = vsub.f32 %v742, %v768
        %v777 = vmul.f32 %v769, 1.442695
        %v778 = vpow.pop %v777
        %v779 = vmul.f32 %v770, 1.442695
        %v780 = vpow.pop %v779
        %v781 = vmul.f32 %v771, 1.442695
        %v782 = vpow.pop %v781
        %v783 = vmul.f32 %v772, 1.442695
        %v784 = vpow.pop %v783
        %v785 = vmul.f32 %v773, 1.442695
        %v786 = vpow.pop %v785
        %v787 = vmul.f32 %v774, 1.442695
        %v788 = vpow.pop %v787
        %v789 = vmul.f32 %v775, 1.442695
        %v790 = vpow.pop %v789
        %v791 = vmul.f32 %v776, 1.442695
        %v792 = vpow.pop %v791
        %v793 = vsel %vm542, %v778, 0.0
        %794 = vadd.xlane.f32.xlu0 %v793
        %v795 = vpop.xlane.xlu0 %794
        %v796 = vsel %vm542, %v780, 0.0
        %797 = vadd.xlane.f32.xlu0 %v796
        %v798 = vpop.xlane.xlu0 %797
        %v799 = vsel %vm542, %v782, 0.0
        %800 = vadd.xlane.f32.xlu0 %v799
        %v801 = vpop.xlane.xlu0 %800
        %v802 = vsel %vm542, %v784, 0.0
        %803 = vadd.xlane.f32.xlu0 %v802
        %v804 = vpop.xlane.xlu0 %803
        %v805 = vsel %vm542, %v786, 0.0
        %806 = vadd.xlane.f32.xlu0 %v805
        %v807 = vpop.xlane.xlu0 %806
        %v808 = vsel %vm542, %v788, 0.0
        %809 = vadd.xlane.f32.xlu0 %v808
        %v810 = vpop.xlane.xlu0 %809
        %v811 = vsel %vm542, %v790, 0.0
        %812 = vadd.xlane.f32.xlu0 %v811
        %v813 = vpop.xlane.xlu0 %812
        %v814 = vsel %vm542, %v792, 0.0
        %815 = vadd.xlane.f32.xlu0 %v814
        %v816 = vpop.xlane.xlu0 %815
        %v817 = vrcp.pop %v795
        %v818 = vrcp.pop %v798
        %v819 = vrcp.pop %v801
        %v820 = vrcp.pop %v804
        %v821 = vrcp.pop %v807
        %v822 = vrcp.pop %v810
        %v823 = vrcp.pop %v813
        %v824 = vrcp.pop %v816
        %v825 = vmul.f32 %v778, %v817
        %v826 = vmul.f32 %v780, %v818
        %v827 = vmul.f32 %v782, %v819
        %v828 = vmul.f32 %v784, %v820
        %v829 = vmul.f32 %v786, %v821
        %v830 = vmul.f32 %v788, %v822
        %v831 = vmul.f32 %v790, %v823
        %v832 = vmul.f32 %v792, %v824
        %v834 = vsel %vm542, %v825, 0
        %v837 = vsel %vm542, %v826, 0
        %v840 = vsel %vm542, %v827, 0
        %v843 = vsel %vm542, %v828, 0
        %v846 = vsel %vm542, %v829, 0
        %v849 = vsel %vm542, %v830, 0
        %v852 = vsel %vm542, %v831, 0
        %v855 = vsel %vm542, %v832, 0
        %857 = vmatprep.subr.mxu0 0.0
        %858 = vmatpush1.msra.mxu0 0.0
        %859 = vmatprep.subr.mxu0 0.0
        %860 = vmatpush1.msra.mxu0 0.0
        %861 = vmatprep.subr.mxu0 0.0
        %862 = vmatpush1.msra.mxu0 0.0
        %863 = vmatprep.subr.mxu0 0.0
        %864 = vmatpush1.msra.mxu0 0.0
        %865 = vmatprep.subr.mxu0 0.0
        %866 = vmatpush1.msra.mxu0 0.0
        %867 = vmatprep.subr.mxu0 0.0
        %868 = vmatpush1.msra.mxu0 0.0
        %869 = vmatprep.subr.mxu0 0.0
        %870 = vmatpush1.msra.mxu0 0.0
        %871 = vmatprep.subr.mxu0 0.0
        %872 = vmatpush1.msra.mxu0 0.0
        %873 = vmatprep.subr.mxu0 0.0
        %874 = vmatpush1.msra.mxu0 0.0
        %875 = vmatprep.subr.mxu0 0.0
        %876 = vmatpush1.msra.mxu0 0.0
        %877 = vmatprep.subr.mxu0 0.0
        %878 = vmatpush1.msra.mxu0 0.0
        %879 = vmatprep.subr.mxu0 0.0
        %880 = vmatpush1.msra.mxu0 0.0
        %881 = vmatprep.subr.mxu0 0.0
        %882 = vmatpush1.msra.mxu0 0.0
        %883 = vmatprep.subr.mxu0 0.0
        %884 = vmatpush1.msra.mxu0 0.0
        %885 = vmatprep.subr.mxu0 0.0
        %886 = vmatpush1.msra.mxu0 0.0
        %887 = vmatprep.subr.mxu0 0.0
        %888 = vmatpush1.msra.mxu0 %v639
        %889 = vmatprep.subr.mxu0 0.0
        %890 = vmatpush2.msra.mxu0 0.0
        %891 = vmatprep.subr.mxu0 0.0
        %892 = vmatpush2.msra.mxu0 0.0
        %893 = vmatprep.subr.mxu0 0.0
        %894 = vmatpush2.msra.mxu0 0.0
        %895 = vmatprep.subr.mxu0 0.0
        %896 = vmatpush2.msra.mxu0 0.0
        %897 = vmatprep.subr.mxu0 0.0
        %898 = vmatpush2.msra.mxu0 0.0
        %899 = vmatprep.subr.mxu0 0.0
        %900 = vmatpush2.msra.mxu0 0.0
        %901 = vmatprep.subr.mxu0 0.0
        %902 = vmatpush2.msra.mxu0 0.0
        %903 = vmatprep.subr.mxu0 0.0
        %904 = vmatpush2.msra.mxu0 0.0
        %905 = vmatprep.subr.mxu0 0.0
        %906 = vmatpush2.msra.mxu0 0.0
        %907 = vmatprep.subr.mxu0 0.0
        %908 = vmatpush2.msra.mxu0 0.0
        %909 = vmatprep.subr.mxu0 0.0
        %910 = vmatpush2.msra.mxu0 0.0
        %911 = vmatprep.subr.mxu0 0.0
        %912 = vmatpush2.msra.mxu0 0.0
        %913 = vmatprep.subr.mxu0 0.0
        %914 = vmatpush2.msra.mxu0 0.0
        %915 = vmatprep.subr.mxu0 0.0
        %916 = vmatpush2.msra.mxu0 0.0
        %917 = vmatprep.subr.mxu0 0.0
        %918 = vmatpush2.msra.mxu0 0.0
        %919 = vmatprep.subr.mxu0 0.0
        %920 = vmatpush2.msra.mxu0 0.0
        %921 = vmatprep.mubr.f32.mxu0 0.0
        %922 = vmatmul.mubr.f32.gmra.mxu0 %v834
        %v923 = vpop.f32.mrf.mxu0
        %v924 = vadd.f32 0.0, %v923
        %v925 = vpop.f32.mrf.mxu0
        %926 = vmatprep.mubr.f32.mxu0 0.0
        %927 = vmatmul.mubr.f32.gmra.mxu0 %v837
        %v928 = vpop.f32.mrf.mxu0
        %v929 = vadd.f32 0.0, %v928
        %v930 = vpop.f32.mrf.mxu0
        %931 = vmatprep.mubr.f32.mxu0 0.0
        %932 = vmatmul.mubr.f32.gmra.mxu0 %v840
        %v933 = vpop.f32.mrf.mxu0
        %v934 = vadd.f32 0.0, %v933
        %v935 = vpop.f32.mrf.mxu0
        %936 = vmatprep.mubr.f32.mxu0 0.0
        %937 = vmatmul.mubr.f32.gmra.mxu0 %v843
        %v938 = vpop.f32.mrf.mxu0
        %v939 = vadd.f32 0.0, %v938
        %v940 = vpop.f32.mrf.mxu0
        %941 = vmatprep.mubr.f32.mxu0 0.0
        %942 = vmatmul.mubr.f32.gmra.mxu0 %v846
        %v943 = vpop.f32.mrf.mxu0
        %v944 = vadd.f32 0.0, %v943
        %v945 = vpop.f32.mrf.mxu0
        %946 = vmatprep.mubr.f32.mxu0 0.0
        %947 = vmatmul.mubr.f32.gmra.mxu0 %v849
        %v948 = vpop.f32.mrf.mxu0
        %v949 = vadd.f32 0.0, %v948
        %v950 = vpop.f32.mrf.mxu0
        %951 = vmatprep.mubr.f32.mxu0 0.0
        %952 = vmatmul.mubr.f32.gmra.mxu0 %v852
        %v953 = vpop.f32.mrf.mxu0
        %v954 = vadd.f32 0.0, %v953
        %v955 = vpop.f32.mrf.mxu0
        %956 = vmatprep.mubr.f32.mxu0 0.0
        %957 = vmatmul.mubr.f32.gmra.mxu0 %v855
        %v958 = vpop.f32.mrf.mxu0
        %v959 = vadd.f32 0.0, %v958
        %v960 = vpop.f32.mrf.mxu0
        %961 = vdwg.mxu0
        %v962 = vadd.f32 %v624, %v924
        %v963 = vadd.f32 %v625, %v929
        %v964 = vadd.f32 %v626, %v934
        %v965 = vadd.f32 %v627, %v939
        %v966 = vadd.f32 %v628, %v944
        %v967 = vadd.f32 %v629, %v949
        %v968 = vadd.f32 %v630, %v954
        %v969 = vadd.f32 %v631, %v959
        %vm970 = vcmask 130048
        %971 = vst.msk [vmem:[%s383] sm:$0xff] %vm970, %v962
        %972 = vst.msk [vmem:[%s383 + $0x8] sm:$0xff] %vm970, %v963
        %973 = vst.msk [vmem:[%s383 + $0x10] sm:$0xff] %vm970, %v964
        %974 = vst.msk [vmem:[%s383 + $0x18] sm:$0xff] %vm970, %v965
        %975 = vst.msk [vmem:[%s383 + $0x20] sm:$0xff] %vm970, %v966
        %976 = vst.msk [vmem:[%s383 + $0x28] sm:$0xff] %vm970, %v967
        %977 = vst.msk [vmem:[%s383 + $0x30] sm:$0xff] %vm970, %v968
        %978 = vst.msk [vmem:[%s383 + $0x38] sm:$0xff] %vm970, %v969
        %v979 = vsel %vm970, %v962, 0.0
        %v980 = vsel %vm970, %v963, 0.0
        %v981 = vadd.f32 %v979, %v980
        %v982 = vsel %vm970, %v964, 0.0
        %v983 = vadd.f32 %v981, %v982
        %v984 = vsel %vm970, %v965, 0.0
        %v985 = vadd.f32 %v983, %v984
        %v986 = vsel %vm970, %v966, 0.0
        %v987 = vadd.f32 %v985, %v986
        %v988 = vsel %vm970, %v967, 0.0
        %v989 = vadd.f32 %v987, %v988
        %v990 = vsel %vm970, %v968, 0.0
        %v991 = vadd.f32 %v989, %v990
        %v992 = vsel %vm970, %v969, 0.0
        %v993 = vadd.f32 %v991, %v992
        %v994 = vrot.slane %v993, 4
        %v995 = vadd.f32 %v993, %v994
        %v996 = vrot.slane %v995, 2
        %v997 = vadd.f32 %v995, %v996
        %v998 = vrot.slane %v997, 1
        %v999 = vadd.f32 %v997, %v998
        %vm1000 = vcmask 122880
        %1001 = vst.msk [vmem:[%s354] sm:$0x1] %vm1000, %v999
        %v1002 = vmul.f32 %v962, %v962
        %v1003 = vmul.f32 %v963, %v963
        %v1004 = vmul.f32 %v964, %v964
        %v1005 = vmul.f32 %v965, %v965
        %v1006 = vmul.f32 %v966, %v966
        %v1007 = vmul.f32 %v967, %v967
        %v1008 = vmul.f32 %v968, %v968
        %v1009 = vmul.f32 %v969, %v969
        %v1010 = vsel %vm970, %v1002, 0.0
        %v1011 = vsel %vm970, %v1003, 0.0
        %v1012 = vadd.f32 %v1010, %v1011
        %v1013 = vsel %vm970, %v1004, 0.0
        %v1014 = vadd.f32 %v1012, %v1013
        %v1015 = vsel %vm970, %v1005, 0.0
        %v1016 = vadd.f32 %v1014, %v1015
        %v1017 = vsel %vm970, %v1006, 0.0
        %v1018 = vadd.f32 %v1016, %v1017
        %v1019 = vsel %vm970, %v1007, 0.0
        %v1020 = vadd.f32 %v1018, %v1019
        %v1021 = vsel %vm970, %v1008, 0.0
        %v1022 = vadd.f32 %v1020, %v1021
        %v1023 = vsel %vm970, %v1009, 0.0
        %v1024 = vadd.f32 %v1022, %v1023
        %v1025 = vrot.slane %v1024, 4
        %v1026 = vadd.f32 %v1024, %v1025
        %v1027 = vrot.slane %v1026, 2
        %v1028 = vadd.f32 %v1026, %v1027
        %v1029 = vrot.slane %v1028, 1
        %v1030 = vadd.f32 %v1028, %v1029
        %1031 = vst.msk [vmem:[%s360] sm:$0x1] %vm1000, %v1030
        %s1032 = smul.u32 8, %s31
        %p1033 = scmp.lt.s32.totalorder %s30, 1
        %s1034 = scalar_select %p1033, %s30, 1
        %p1035 = scmp.lt.s32.totalorder %s1032, 7
        %s1036 = scalar_select %p1035, %s1032, 7
        %s1037 = smul.addr %s1034, 8
        %s1038 = sadd.s32 %s1036, %s1037
        %s1039 = smul.addr %s1038, 8
        %s1040 = scalar_lea.vmem %s6, %s1039
        %s1041 = sand.u32 %s214, 1
        %s1042 = scalar_lea.sflag [#allocation3], %s1041
        %s1043 = sand.u32 %s214, 1
        %s1044 = scalar_lea.vmem [#allocation2], %s1043
        %s1045 = sand.u32 %s242, 1
        %s1046 = scalar_lea.sflag [#allocation5], %s1045
        %s1047 = sand.u32 %s242, 1
        %s1048 = scalar_lea.vmem [#allocation4], %s1047
        // Predicated region
        $region45: #{tpu_custom_call.1} parent=43 // pred_check
          %p1049 = pneg %p196
        $region46: #{tpu_custom_call.1} parent=43 // pred_check_branch
          %1051 = sbr.rel (%p1049) target = $region48
        $region47: #{tpu_custom_call.1} parent=43 // pred_region
          %s1052 = smul.u32 8, %s31
        $region48: #{tpu_custom_call.1} parent=43 // pred_fallthru
          _
        // Predicated region
        $region49: #{tpu_custom_call.1} parent=43 // pred_check
          %p1053 = pneg %p224
        $region50: #{tpu_custom_call.1} parent=43 // pred_check_branch
          %1055 = sbr.rel (%p1053) target = $region52
        $region51: #{tpu_custom_call.1} parent=43 // pred_region
          %s1057 = ssub.s32 16, 16
          %1058 = vsyncadd %s1042, %s1057
          %s1059 = sadd.s32 %s31, %s30
          %s1060 = smul.addr %s1059, 16
          %s1061 = scalar_lea.hbm %s7, %s1060
          %s1063 = sshll.u32 %s1044, 4
          %s1064 = int_to_ptr.vmem [resolvable:$true] %s1063
          %1066 = dma.vmem_to_hbm [thread:$0]  %s1064, 16, %s1061, %s1042
        $region52: #{tpu_custom_call.1} parent=43 // pred_fallthru
          _
        // Predicated region
        $region53: #{tpu_custom_call.1} parent=43 // pred_check
          %p1067 = pneg %p252
        $region54: #{tpu_custom_call.1} parent=43 // pred_check_branch
          %1069 = sbr.rel (%p1067) target = $region56
        $region55: #{tpu_custom_call.1} parent=43 // pred_region
          %s1071 = ssub.s32 16, 16
          %1072 = vsyncadd %s1046, %s1071
          %s1073 = sadd.s32 %s31, %s30
          %s1074 = smul.addr %s1073, 16
          %s1075 = scalar_lea.hbm %s8, %s1074
          %s1077 = sshll.u32 %s1048, 4
          %s1078 = int_to_ptr.vmem [resolvable:$true] %s1077
          %1080 = dma.vmem_to_hbm [thread:$0]  %s1078, 16, %s1075, %s1046
        $region56: #{tpu_custom_call.1} parent=43 // pred_fallthru
          _
      $region44: #{tpu_custom_call.1} parent=5 // pred_fallthru
        _
      %p1081 = scmp.le.s32.totalorder 2, %s21
      // Predicated region
      $region57: #{tpu_custom_call.1} parent=5 // pred_check
        %p1082 = pneg %p1081
      $region58: #{tpu_custom_call.1} parent=5 // pred_check_branch
        %1084 = sbr.rel (%p1082) target = $region60
      $region59: #{tpu_custom_call.1} parent=5 // pred_region
        %s1085 = ssub.s32 %s21, 2
        // Predicated region
        $region61: #{tpu_custom_call.1} parent=59 // pred_check
          %p1086 = pneg %p202
        $region62: #{tpu_custom_call.1} parent=59 // pred_check_branch
          %1088 = sbr.rel (%p1086) target = $region64
        $region63: #{tpu_custom_call.1} parent=59 // pred_region
          %s1089 = smul.u32 8, %s33
          %p1090 = scmp.lt.s32.totalorder %s32, 1
          %s1091 = scalar_select %p1090, %s32, 1
          %p1092 = scmp.lt.s32.totalorder %s1089, 7
          %s1093 = scalar_select %p1092, %s1089, 7
          %s1094 = smul.addr %s1091, 8
          %s1095 = sadd.s32 %s1093, %s1094
          %s1096 = smul.addr %s1095, 8
          %s1097 = scalar_lea.vmem %s6, %s1096
        $region64: #{tpu_custom_call.1} parent=59 // pred_fallthru
          _
        // Predicated region
        $region65: #{tpu_custom_call.1} parent=59 // pred_check
          %p1098 = pneg %p230
        $region66: #{tpu_custom_call.1} parent=59 // pred_check_branch
          %1100 = sbr.rel (%p1098) target = $region68
        $region67: #{tpu_custom_call.1} parent=59 // pred_region
          %s1101 = sand.u32 %s215, 1
          %s1102 = scalar_lea.sflag [#allocation3], %s1101
          %s1103 = sand.u32 %s215, 1
          %s1104 = scalar_lea.vmem [#allocation2], %s1103
          %1105 = dma.done %s1102, 16
        $region68: #{tpu_custom_call.1} parent=59 // pred_fallthru
          _
        // Predicated region
        $region69: #{tpu_custom_call.1} parent=59 // pred_check
          %p1106 = pneg %p258
        $region70: #{tpu_custom_call.1} parent=59 // pred_check_branch
          %1108 = sbr.rel (%p1106) target = $region72
        $region71: #{tpu_custom_call.1} parent=59 // pred_region
          %s1109 = sand.u32 %s243, 1
          %s1110 = scalar_lea.sflag [#allocation5], %s1109
          %s1111 = sand.u32 %s243, 1
          %s1112 = scalar_lea.vmem [#allocation4], %s1111
          %1113 = dma.done %s1110, 16
        $region72: #{tpu_custom_call.1} parent=59 // pred_fallthru
          _
      $region60: #{tpu_custom_call.1} parent=5 // pred_fallthru
        _
    $region6: #{tpu_custom_call.1} parent=1 // loop_footer
      %s25 = sadd.s32 1, %s21
    $region7: #{tpu_custom_call.1} parent=1 // loop_footer_branch
      %20 = sbr.rel target = $region3
    $region8: #{tpu_custom_call.1} parent=1 // loop_exit
      _
    %1114 = vsyncpa [#allocation3], 1
    %s1115 = scalar_lea.sflag [#allocation3], 1
    %1116 = vsyncpa %s1115, 1
    %1117 = vsyncpa [#allocation5], 1
    %s1118 = scalar_lea.sflag [#allocation5], 1
    %1119 = vsyncpa %s1118, 1

</llo_original>
